<compile_context>
chip_gen: v7x
topology: tpu7x:2x2x1
jax: 0.10.0
libtpu: 0.0.40
codegen_flags: <defaults>
</compile_context>

<pallas_src>
import functools

import jax
import jax.numpy as jnp
from jax.experimental import pallas as pl
from jax.experimental.pallas import tpu as pltpu


# ----------------------------------------------------------------------------
# Fused Pallas kernel: (folded) conv-embedding + LSTM recurrence + final Linear
# ----------------------------------------------------------------------------
def _make_fused_kernel(T, B, H):
    def kernel(patches_ref, wih_ref, bias_ref, whh_ref, linw_ref, linb_ref,
               out_ref):
        # Input-to-hidden gate projections for ALL timesteps in one MXU call.
        # Rows are t-major: row = t*B + b.  Conv weights+bias already folded in.
        gates_ih = (
            jnp.dot(patches_ref[...], wih_ref[...],
                    preferred_element_type=jnp.float32)
            + bias_ref[...]
        )
        h = jnp.zeros((B, H), jnp.float32)
        c = jnp.zeros((B, H), jnp.float32)
        # T is small and static -> fully unrolled at trace time.
        for t in range(T):
            gates = gates_ih[t * B:(t + 1) * B, :] + jnp.dot(
                h, whh_ref[...], preferred_element_type=jnp.float32)
            # PyTorch gate order [i, f, g, o].  Sigmoid over the full lane-dense
            # (B, 4H) row in one EUP pass, then slice.
            sg = jax.nn.sigmoid(gates)
            i_g = sg[:, 0 * H:1 * H]
            f_g = sg[:, 1 * H:2 * H]
            o_g = sg[:, 3 * H:4 * H]
            g_g = jnp.tanh(gates[:, 2 * H:3 * H])
            c = f_g * c + i_g * g_g
            h = o_g * jnp.tanh(c)
        # to_image_space Linear on the final hidden state (lane-dense output),
        # emitted in the same kernel so hn never touches HBM.
        out_ref[...] = (
            jnp.dot(h, linw_ref[...], preferred_element_type=jnp.float32)
            + linb_ref[...]
        )

    return kernel


# ----------------------------------------------------------------------------
# Forward pass
# ----------------------------------------------------------------------------
def conv_lstm_vit_forward(x, kp, *, emb_size, hidden_dim, img_size):
    """x: (B, T, C, H, W) float32 -> (B, hidden_dim, img_h, img_w)."""
    del emb_size  # folded offline into the LSTM input weight
    B, T, C, H, W = x.shape
    img_h, img_w = img_size
    OH = (H + 2 - 3) // 3 + 1          # Conv2d k=3, s=3, p=1
    OW = (W + 2 - 3) // 3 + 1
    P = OH * OW
    Hd = hidden_dim
    K = C * 9
    PK = P * K
    PKp = kp["w_ih"].shape[0]          # contraction dim zero-padded lane-dense
    N_out = Hd * img_h * img_w

    # ---- vectorized im2col: pad + slice + reshape + ONE transpose ----------
    xp = jnp.pad(x, ((0, 0), (0, 0), (0, 0), (1, 1), (1, 1)))
    xp = xp[:, :, :, :3 * OH, :3 * OW]
    xp = xp.reshape(B, T, C, OH, 3, OW, 3)
    # -> (T, B, OH, OW, C, kh, kw): rows are t-major (t*B + b), per-row feature
    # order (p, c, kh, kw) to match the folded weight layout.
    patches = jnp.transpose(xp, (1, 0, 3, 5, 2, 4, 6)).reshape(T * B, PK)
    patches = jnp.pad(patches, ((0, 0), (0, PKp - PK)))

    kernel = _make_fused_kernel(T, B, Hd)

    out_flat = pl.pallas_call(
        kernel,
        out_shape=jax.ShapeDtypeStruct((B, N_out), jnp.float32),
        grid=(1,),
        in_specs=[
            pl.BlockSpec((T * B, PKp), lambda i: (0, 0)),     # im2col patches
            pl.BlockSpec((PKp, 4 * Hd), lambda i: (0, 0)),    # folded W_ih
            pl.BlockSpec((1, 4 * Hd), lambda i: (0, 0)),      # folded gate bias
            pl.BlockSpec((Hd, 4 * Hd), lambda i: (0, 0)),     # W_hh^T
            pl.BlockSpec((Hd, N_out), lambda i: (0, 0)),      # lin W^T
            pl.BlockSpec((1, N_out), lambda i: (0, 0)),       # lin bias
        ],
        out_specs=pl.BlockSpec((B, N_out), lambda i: (0, 0)),
        compiler_params=pltpu.CompilerParams(
            dimension_semantics=("arbitrary",)),
    )(patches, kp["w_ih"], kp["bias"], kp["w_hh"], kp["lin_w"], kp["lin_b"])

    # Rearrange('b (c h w) -> b c h w') is just a reshape of the flat output.
    return out_flat.reshape(B, Hd, img_h, img_w)


# ----------------------------------------------------------------------------
# Parameters: raw PyTorch-shaped init + one-time offline folding for the kernel
# ----------------------------------------------------------------------------
def init_params(key, *, input_channels, emb_size, hidden_dim, img_size):
    img_h, img_w = img_size
    num_patches = (img_h // 3) * (img_w // 3)
    lstm_input_size = emb_size * num_patches
    keys = jax.random.split(key, 8)
    s = 0.05
    return {
        "conv_w": s * jax.random.normal(keys[0], (emb_size, input_channels, 3, 3), jnp.float32),
        "conv_b": s * jax.random.normal(keys[1], (emb_size,), jnp.float32),
        "lstm_w_ih": s * jax.random.normal(keys[2], (4 * hidden_dim, lstm_input_size), jnp.float32),
        "lstm_w_hh": s * jax.random.normal(keys[3], (4 * hidden_dim, hidden_dim), jnp.float32),
        "lstm_b_ih": s * jax.random.normal(keys[4], (4 * hidden_dim,), jnp.float32),
        "lstm_b_hh": s * jax.random.normal(keys[5], (4 * hidden_dim,), jnp.float32),
        "lin_w": s * jax.random.normal(keys[6], (hidden_dim * img_h * img_w, hidden_dim), jnp.float32),
        "lin_b": s * jax.random.normal(keys[7], (hidden_dim * img_h * img_w,), jnp.float32),
    }


def prepare_params(params, *, input_channels, emb_size, hidden_dim, img_size):
    """One-time offline folding: conv -> LSTM input weight, transposes, biases."""
    C, E, H = input_channels, emb_size, hidden_dim
    img_h, img_w = img_size
    OH = (img_h + 2 - 3) // 3 + 1
    OW = (img_w + 2 - 3) // 3 + 1
    P = OH * OW
    K = C * 9
    PK = P * K
    PKp = ((PK + 127) // 128) * 128                  # lane-dense contraction

    conv_w = params["conv_w"].reshape(E, K)          # (E, C*9), (c,kh,kw) cols

    # LSTM input weight: torch flattens the conv output as (e h w) -> feature
    # index = e*P + p.  Reorder to (P, E, 4H) so it composes per-patch.
    w_ih = params["lstm_w_ih"].reshape(4 * H, E, P)
    w_ih = jnp.transpose(w_ih, (2, 1, 0))            # (P, E, 4H)

    # Fold the conv weight into the gate projection: W_comb[p] = conv_W^T @ W_ih[p]
    w_comb = jnp.einsum("ek,peg->pkg", conv_w, w_ih,
                        precision=jax.lax.Precision.HIGHEST)   # (P, K, 4H)
    w_comb = w_comb.reshape(PK, 4 * H)
    w_comb = jnp.pad(w_comb, ((0, PKp - PK), (0, 0)))          # (PKp, 4H)

    # Gate bias: b_ih + b_hh + conv bias pushed through all P patch projections.
    conv_b_term = jnp.einsum("e,peg->g", params["conv_b"], w_ih,
                             precision=jax.lax.Precision.HIGHEST)
    bias = (params["lstm_b_ih"] + params["lstm_b_hh"] + conv_b_term).reshape(1, 4 * H)

    w_hh = params["lstm_w_hh"].T                     # (H, 4H)
    lin_w = params["lin_w"].T                        # (H, H*img_h*img_w)
    lin_b = params["lin_b"].reshape(1, -1)

    return {"w_ih": w_comb, "bias": bias, "w_hh": w_hh,
            "lin_w": lin_w, "lin_b": lin_b}


# ----------------------------------------------------------------------------
# Pure-JAX reference (for a correctness check against the fused kernel)
# ----------------------------------------------------------------------------
def reference_forward(x, params, *, emb_size, hidden_dim, img_size):
    B, T, C, H, W = x.shape
    img_h, img_w = img_size
    Hd = hidden_dim
    x_bt = x.reshape(B * T, C, H, W)
    y = jax.lax.conv_general_dilated(
        x_bt, params["conv_w"], window_strides=(3, 3),
        padding=((1, 1), (1, 1)), dimension_numbers=("NCHW", "OIHW", "NCHW"))
    y = y + params["conv_b"][None, :, None, None]
    BT, E, OH, OW = y.shape
    lstm_in = y.reshape(B, T, E * OH * OW)           # '(b t) e h w -> b t (e h w)'
    h = jnp.zeros((B, Hd), jnp.float32)
    c = jnp.zeros((B, Hd), jnp.float32)
    for t in range(T):
        gates = (lstm_in[:, t] @ params["lstm_w_ih"].T
                 + h @ params["lstm_w_hh"].T
                 + params["lstm_b_ih"] + params["lstm_b_hh"])
        i_g = jax.nn.sigmoid(gates[:, 0 * Hd:1 * Hd])
        f_g = jax.nn.sigmoid(gates[:, 1 * Hd:2 * Hd])
        g_g = jnp.tanh(gates[:, 2 * Hd:3 * Hd])
        o_g = jax.nn.sigmoid(gates[:, 3 * Hd:4 * Hd])
        c = f_g * c + i_g * g_g
        h = o_g * jnp.tanh(c)
    out = h @ params["lin_w"].T + params["lin_b"]
    return out.reshape(B, Hd, img_h, img_w)


if __name__ == "__main__":
    # Small shapes consistent with the module (img_size=(6,6), seq_len=5).
    B, T = 2, 5
    input_channels = 4
    img_size = (6, 6)
    emb_size = 128
    hidden_dim = 32

    key = jax.random.PRNGKey(0)
    k_x, k_p = jax.random.split(key)
    x = jax.random.normal(
        k_x, (B, T, input_channels, img_size[0], img_size[1]), jnp.float32)

    raw_params = init_params(
        k_p, input_channels=input_channels, emb_size=emb_size,
        hidden_dim=hidden_dim, img_size=img_size)
    kparams = prepare_params(
        raw_params, input_channels=input_channels, emb_size=emb_size,
        hidden_dim=hidden_dim, img_size=img_size)

    fwd = jax.jit(functools.partial(
        conv_lstm_vit_forward, emb_size=emb_size, hidden_dim=hidden_dim,
        img_size=img_size))
    out = fwd(x, kparams)
    jax.block_until_ready(out)

    assert out.shape == (B, hidden_dim, img_size[0], img_size[1]), out.shape
    assert out.dtype == jnp.float32

    ref = jax.jit(functools.partial(
        reference_forward, emb_size=emb_size, hidden_dim=hidden_dim,
        img_size=img_size))(x, raw_params)
    jax.block_until_ready(ref)
    assert bool(jnp.allclose(out, ref, rtol=1e-3, atol=1e-4)), (
        float(jnp.max(jnp.abs(out - ref))))

    print("KERNEL_OK")
</pallas_src>

<mosaic_0001>
module attributes {stable_mosaic.version = 11 : i64} {
  func.func @kernel(%arg0: i32, %arg1: memref<10x256xf32, #tpu.memory_space<vmem>>, %arg2: memref<256x128xf32, #tpu.memory_space<vmem>>, %arg3: memref<1x128xf32, #tpu.memory_space<vmem>>, %arg4: memref<32x128xf32, #tpu.memory_space<vmem>>, %arg5: memref<32x1152xf32, #tpu.memory_space<vmem>>, %arg6: memref<1x1152xf32, #tpu.memory_space<vmem>>, %arg7: memref<2x1152xf32, #tpu.memory_space<vmem>>) attributes {dimension_semantics = [#tpu.dimension_semantics<arbitrary>], iteration_bounds = array<i64: 1>, scalar_prefetch = 0 : i64, scratch_operands = 0 : i64, tpu.core_type = #tpu.core_type<tc>, window_params = [{pipeline_mode = #tpu.pipeline_mode<synchronous>, transform_indices = @transform_0, window_bounds = array<i64: 10, 256>}, {pipeline_mode = #tpu.pipeline_mode<synchronous>, transform_indices = @transform_1, window_bounds = array<i64: 256, 128>}, {pipeline_mode = #tpu.pipeline_mode<synchronous>, transform_indices = @transform_2, window_bounds = array<i64: 1, 128>}, {pipeline_mode = #tpu.pipeline_mode<synchronous>, transform_indices = @transform_3, window_bounds = array<i64: 32, 128>}, {pipeline_mode = #tpu.pipeline_mode<synchronous>, transform_indices = @transform_4, window_bounds = array<i64: 32, 1152>}, {pipeline_mode = #tpu.pipeline_mode<synchronous>, transform_indices = @transform_5, window_bounds = array<i64: 1, 1152>}, {pipeline_mode = #tpu.pipeline_mode<synchronous>, transform_indices = @transform_6, window_bounds = array<i64: 2, 1152>}]} {
    %c0 = arith.constant 0 : index
    %c0_0 = arith.constant 0 : index
    %0 = vector.load %arg1[%c0, %c0_0] : memref<10x256xf32, #tpu.memory_space<vmem>>, vector<10x256xf32>
    %c0_1 = arith.constant 0 : index
    %c0_2 = arith.constant 0 : index
    %1 = vector.load %arg2[%c0_1, %c0_2] : memref<256x128xf32, #tpu.memory_space<vmem>>, vector<256x128xf32>
    %cst = arith.constant dense<0.000000e+00> : vector<10x128xf32>
    %2 = tpu.matmul %0, %1, %cst {dimension_numbers = #tpu.dot_dimension_numbers<[1], [0], [0], [1], [0, 0, 1, 1], [], []>} : vector<10x256xf32>, vector<256x128xf32>, vector<10x128xf32> -> vector<10x128xf32>
    %c0_3 = arith.constant 0 : index
    %c0_4 = arith.constant 0 : index
    %3 = vector.load %arg3[%c0_3, %c0_4] : memref<1x128xf32, #tpu.memory_space<vmem>>, vector<1x128xf32>
    %4 = vector.broadcast %3 : vector<1x128xf32> to vector<10x128xf32>
    %5 = arith.addf %2, %4 : vector<10x128xf32>
    %cst_5 = arith.constant 0.000000e+00 : f32
    %6 = vector.broadcast %cst_5 : f32 to vector<2x32xf32>
    %cst_6 = arith.constant 0.000000e+00 : f32
    %7 = vector.broadcast %cst_6 : f32 to vector<2x32xf32>
    %8 = vector.extract_strided_slice %5 {offsets = [0, 0], sizes = [2, 128], strides = [1, 1]} : vector<10x128xf32> to vector<2x128xf32>
    %c0_7 = arith.constant 0 : index
    %c0_8 = arith.constant 0 : index
    %9 = vector.load %arg4[%c0_7, %c0_8] : memref<32x128xf32, #tpu.memory_space<vmem>>, vector<32x128xf32>
    %cst_9 = arith.constant dense<0.000000e+00> : vector<2x128xf32>
    %10 = tpu.matmul %6, %9, %cst_9 {dimension_numbers = #tpu.dot_dimension_numbers<[1], [0], [0], [1], [0, 0, 1, 1], [], []>} : vector<2x32xf32>, vector<32x128xf32>, vector<2x128xf32> -> vector<2x128xf32>
    %11 = arith.addf %8, %10 : vector<2x128xf32>
    %12 = arith.negf %11 : vector<2x128xf32>
    %13 = math.exp %12 : vector<2x128xf32>
    %cst_10 = arith.constant 1.000000e+00 : f32
    %14 = vector.broadcast %cst_10 : f32 to vector<2x128xf32>
    %15 = arith.addf %14, %13 : vector<2x128xf32>
    %16 = arith.divf %14, %15 : vector<2x128xf32>
    %17 = vector.extract_strided_slice %16 {offsets = [0, 0], sizes = [2, 32], strides = [1, 1]} : vector<2x128xf32> to vector<2x32xf32>
    %18 = vector.extract_strided_slice %16 {offsets = [0, 32], sizes = [2, 32], strides = [1, 1]} : vector<2x128xf32> to vector<2x32xf32>
    %19 = vector.extract_strided_slice %16 {offsets = [0, 96], sizes = [2, 32], strides = [1, 1]} : vector<2x128xf32> to vector<2x32xf32>
    %20 = vector.extract_strided_slice %11 {offsets = [0, 64], sizes = [2, 32], strides = [1, 1]} : vector<2x128xf32> to vector<2x32xf32>
    %21 = math.tanh %20 : vector<2x32xf32>
    %22 = arith.mulf %18, %7 : vector<2x32xf32>
    %23 = arith.mulf %17, %21 : vector<2x32xf32>
    %24 = arith.addf %22, %23 : vector<2x32xf32>
    %25 = math.tanh %24 : vector<2x32xf32>
    %26 = arith.mulf %19, %25 : vector<2x32xf32>
    %27 = vector.extract_strided_slice %5 {offsets = [2, 0], sizes = [2, 128], strides = [1, 1]} : vector<10x128xf32> to vector<2x128xf32>
    %c0_11 = arith.constant 0 : index
    %c0_12 = arith.constant 0 : index
    %28 = vector.load %arg4[%c0_11, %c0_12] : memref<32x128xf32, #tpu.memory_space<vmem>>, vector<32x128xf32>
    %cst_13 = arith.constant dense<0.000000e+00> : vector<2x128xf32>
    %29 = tpu.matmul %26, %28, %cst_13 {dimension_numbers = #tpu.dot_dimension_numbers<[1], [0], [0], [1], [0, 0, 1, 1], [], []>} : vector<2x32xf32>, vector<32x128xf32>, vector<2x128xf32> -> vector<2x128xf32>
    %30 = arith.addf %27, %29 : vector<2x128xf32>
    %31 = arith.negf %30 : vector<2x128xf32>
    %32 = math.exp %31 : vector<2x128xf32>
    %cst_14 = arith.constant 1.000000e+00 : f32
    %33 = vector.broadcast %cst_14 : f32 to vector<2x128xf32>
    %34 = arith.addf %33, %32 : vector<2x128xf32>
    %35 = arith.divf %33, %34 : vector<2x128xf32>
    %36 = vector.extract_strided_slice %35 {offsets = [0, 0], sizes = [2, 32], strides = [1, 1]} : vector<2x128xf32> to vector<2x32xf32>
    %37 = vector.extract_strided_slice %35 {offsets = [0, 32], sizes = [2, 32], strides = [1, 1]} : vector<2x128xf32> to vector<2x32xf32>
    %38 = vector.extract_strided_slice %35 {offsets = [0, 96], sizes = [2, 32], strides = [1, 1]} : vector<2x128xf32> to vector<2x32xf32>
    %39 = vector.extract_strided_slice %30 {offsets = [0, 64], sizes = [2, 32], strides = [1, 1]} : vector<2x128xf32> to vector<2x32xf32>
    %40 = math.tanh %39 : vector<2x32xf32>
    %41 = arith.mulf %37, %24 : vector<2x32xf32>
    %42 = arith.mulf %36, %40 : vector<2x32xf32>
    %43 = arith.addf %41, %42 : vector<2x32xf32>
    %44 = math.tanh %43 : vector<2x32xf32>
    %45 = arith.mulf %38, %44 : vector<2x32xf32>
    %46 = vector.extract_strided_slice %5 {offsets = [4, 0], sizes = [2, 128], strides = [1, 1]} : vector<10x128xf32> to vector<2x128xf32>
    %c0_15 = arith.constant 0 : index
    %c0_16 = arith.constant 0 : index
    %47 = vector.load %arg4[%c0_15, %c0_16] : memref<32x128xf32, #tpu.memory_space<vmem>>, vector<32x128xf32>
    %cst_17 = arith.constant dense<0.000000e+00> : vector<2x128xf32>
    %48 = tpu.matmul %45, %47, %cst_17 {dimension_numbers = #tpu.dot_dimension_numbers<[1], [0], [0], [1], [0, 0, 1, 1], [], []>} : vector<2x32xf32>, vector<32x128xf32>, vector<2x128xf32> -> vector<2x128xf32>
    %49 = arith.addf %46, %48 : vector<2x128xf32>
    %50 = arith.negf %49 : vector<2x128xf32>
    %51 = math.exp %50 : vector<2x128xf32>
    %cst_18 = arith.constant 1.000000e+00 : f32
    %52 = vector.broadcast %cst_18 : f32 to vector<2x128xf32>
    %53 = arith.addf %52, %51 : vector<2x128xf32>
    %54 = arith.divf %52, %53 : vector<2x128xf32>
    %55 = vector.extract_strided_slice %54 {offsets = [0, 0], sizes = [2, 32], strides = [1, 1]} : vector<2x128xf32> to vector<2x32xf32>
    %56 = vector.extract_strided_slice %54 {offsets = [0, 32], sizes = [2, 32], strides = [1, 1]} : vector<2x128xf32> to vector<2x32xf32>
    %57 = vector.extract_strided_slice %54 {offsets = [0, 96], sizes = [2, 32], strides = [1, 1]} : vector<2x128xf32> to vector<2x32xf32>
    %58 = vector.extract_strided_slice %49 {offsets = [0, 64], sizes = [2, 32], strides = [1, 1]} : vector<2x128xf32> to vector<2x32xf32>
    %59 = math.tanh %58 : vector<2x32xf32>
    %60 = arith.mulf %56, %43 : vector<2x32xf32>
    %61 = arith.mulf %55, %59 : vector<2x32xf32>
    %62 = arith.addf %60, %61 : vector<2x32xf32>
    %63 = math.tanh %62 : vector<2x32xf32>
    %64 = arith.mulf %57, %63 : vector<2x32xf32>
    %65 = vector.extract_strided_slice %5 {offsets = [6, 0], sizes = [2, 128], strides = [1, 1]} : vector<10x128xf32> to vector<2x128xf32>
    %c0_19 = arith.constant 0 : index
    %c0_20 = arith.constant 0 : index
    %66 = vector.load %arg4[%c0_19, %c0_20] : memref<32x128xf32, #tpu.memory_space<vmem>>, vector<32x128xf32>
    %cst_21 = arith.constant dense<0.000000e+00> : vector<2x128xf32>
    %67 = tpu.matmul %64, %66, %cst_21 {dimension_numbers = #tpu.dot_dimension_numbers<[1], [0], [0], [1], [0, 0, 1, 1], [], []>} : vector<2x32xf32>, vector<32x128xf32>, vector<2x128xf32> -> vector<2x128xf32>
    %68 = arith.addf %65, %67 : vector<2x128xf32>
    %69 = arith.negf %68 : vector<2x128xf32>
    %70 = math.exp %69 : vector<2x128xf32>
    %cst_22 = arith.constant 1.000000e+00 : f32
    %71 = vector.broadcast %cst_22 : f32 to vector<2x128xf32>
    %72 = arith.addf %71, %70 : vector<2x128xf32>
    %73 = arith.divf %71, %72 : vector<2x128xf32>
    %74 = vector.extract_strided_slice %73 {offsets = [0, 0], sizes = [2, 32], strides = [1, 1]} : vector<2x128xf32> to vector<2x32xf32>
    %75 = vector.extract_strided_slice %73 {offsets = [0, 32], sizes = [2, 32], strides = [1, 1]} : vector<2x128xf32> to vector<2x32xf32>
    %76 = vector.extract_strided_slice %73 {offsets = [0, 96], sizes = [2, 32], strides = [1, 1]} : vector<2x128xf32> to vector<2x32xf32>
    %77 = vector.extract_strided_slice %68 {offsets = [0, 64], sizes = [2, 32], strides = [1, 1]} : vector<2x128xf32> to vector<2x32xf32>
    %78 = math.tanh %77 : vector<2x32xf32>
    %79 = arith.mulf %75, %62 : vector<2x32xf32>
    %80 = arith.mulf %74, %78 : vector<2x32xf32>
    %81 = arith.addf %79, %80 : vector<2x32xf32>
    %82 = math.tanh %81 : vector<2x32xf32>
    %83 = arith.mulf %76, %82 : vector<2x32xf32>
    %84 = vector.extract_strided_slice %5 {offsets = [8, 0], sizes = [2, 128], strides = [1, 1]} : vector<10x128xf32> to vector<2x128xf32>
    %c0_23 = arith.constant 0 : index
    %c0_24 = arith.constant 0 : index
    %85 = vector.load %arg4[%c0_23, %c0_24] : memref<32x128xf32, #tpu.memory_space<vmem>>, vector<32x128xf32>
    %cst_25 = arith.constant dense<0.000000e+00> : vector<2x128xf32>
    %86 = tpu.matmul %83, %85, %cst_25 {dimension_numbers = #tpu.dot_dimension_numbers<[1], [0], [0], [1], [0, 0, 1, 1], [], []>} : vector<2x32xf32>, vector<32x128xf32>, vector<2x128xf32> -> vector<2x128xf32>
    %87 = arith.addf %84, %86 : vector<2x128xf32>
    %88 = arith.negf %87 : vector<2x128xf32>
    %89 = math.exp %88 : vector<2x128xf32>
    %cst_26 = arith.constant 1.000000e+00 : f32
    %90 = vector.broadcast %cst_26 : f32 to vector<2x128xf32>
    %91 = arith.addf %90, %89 : vector<2x128xf32>
    %92 = arith.divf %90, %91 : vector<2x128xf32>
    %93 = vector.extract_strided_slice %92 {offsets = [0, 0], sizes = [2, 32], strides = [1, 1]} : vector<2x128xf32> to vector<2x32xf32>
    %94 = vector.extract_strided_slice %92 {offsets = [0, 32], sizes = [2, 32], strides = [1, 1]} : vector<2x128xf32> to vector<2x32xf32>
    %95 = vector.extract_strided_slice %92 {offsets = [0, 96], sizes = [2, 32], strides = [1, 1]} : vector<2x128xf32> to vector<2x32xf32>
    %96 = vector.extract_strided_slice %87 {offsets = [0, 64], sizes = [2, 32], strides = [1, 1]} : vector<2x128xf32> to vector<2x32xf32>
    %97 = math.tanh %96 : vector<2x32xf32>
    %98 = arith.mulf %94, %81 : vector<2x32xf32>
    %99 = arith.mulf %93, %97 : vector<2x32xf32>
    %100 = arith.addf %98, %99 : vector<2x32xf32>
    %101 = math.tanh %100 : vector<2x32xf32>
    %102 = arith.mulf %95, %101 : vector<2x32xf32>
    %c0_27 = arith.constant 0 : index
    %c0_28 = arith.constant 0 : index
    %103 = vector.load %arg5[%c0_27, %c0_28] : memref<32x1152xf32, #tpu.memory_space<vmem>>, vector<32x1152xf32>
    %cst_29 = arith.constant dense<0.000000e+00> : vector<2x1152xf32>
    %104 = tpu.matmul %102, %103, %cst_29 {dimension_numbers = #tpu.dot_dimension_numbers<[1], [0], [0], [1], [0, 0, 1, 1], [], []>} : vector<2x32xf32>, vector<32x1152xf32>, vector<2x1152xf32> -> vector<2x1152xf32>
    %c0_30 = arith.constant 0 : index
    %c0_31 = arith.constant 0 : index
    %105 = vector.load %arg6[%c0_30, %c0_31] : memref<1x1152xf32, #tpu.memory_space<vmem>>, vector<1x1152xf32>
    %106 = vector.broadcast %105 : vector<1x1152xf32> to vector<2x1152xf32>
    %107 = arith.addf %104, %106 : vector<2x1152xf32>
    %c0_32 = arith.constant 0 : index
    %c0_33 = arith.constant 0 : index
    %108 = vector.load %arg7[%c0_32, %c0_33] : memref<2x1152xf32, #tpu.memory_space<vmem>>, vector<2x1152xf32>
    tpu.vector_store %arg7[%c0_32, %c0_33], %107 {strides = array<i32>} : memref<2x1152xf32, #tpu.memory_space<vmem>>, vector<2x1152xf32>,
    return
  }
  func.func @transform_0(%arg0: i32) -> (i32, i32) {
    %c0_i32 = arith.constant 0 : i32
    %c0_i32_0 = arith.constant 0 : i32
    %c0_i32_1 = arith.constant 0 : i32
    return %c0_i32, %c0_i32_0 : i32, i32
  }
  func.func @transform_1(%arg0: i32) -> (i32, i32) {
    %c0_i32 = arith.constant 0 : i32
    %c0_i32_0 = arith.constant 0 : i32
    %c0_i32_1 = arith.constant 0 : i32
    return %c0_i32, %c0_i32_0 : i32, i32
  }
  func.func @transform_2(%arg0: i32) -> (i32, i32) {
    %c0_i32 = arith.constant 0 : i32
    %c0_i32_0 = arith.constant 0 : i32
    %c0_i32_1 = arith.constant 0 : i32
    return %c0_i32, %c0_i32_0 : i32, i32
  }
  func.func @transform_3(%arg0: i32) -> (i32, i32) {
    %c0_i32 = arith.constant 0 : i32
    %c0_i32_0 = arith.constant 0 : i32
    %c0_i32_1 = arith.constant 0 : i32
    return %c0_i32, %c0_i32_0 : i32, i32
  }
  func.func @transform_4(%arg0: i32) -> (i32, i32) {
    %c0_i32 = arith.constant 0 : i32
    %c0_i32_0 = arith.constant 0 : i32
    %c0_i32_1 = arith.constant 0 : i32
    return %c0_i32, %c0_i32_0 : i32, i32
  }
  func.func @transform_5(%arg0: i32) -> (i32, i32) {
    %c0_i32 = arith.constant 0 : i32
    %c0_i32_0 = arith.constant 0 : i32
    %c0_i32_1 = arith.constant 0 : i32
    return %c0_i32, %c0_i32_0 : i32, i32
  }
  func.func @transform_6(%arg0: i32) -> (i32, i32) {
    %c0_i32 = arith.constant 0 : i32
    %c0_i32_0 = arith.constant 0 : i32
    %c0_i32_1 = arith.constant 0 : i32
    return %c0_i32, %c0_i32_0 : i32, i32
  }
}

</mosaic_0001>

<llo_original>
// kernel: conv_lstm_vit_forward.1
$region0: #{conv_lstm_vit_forward.1}
  #allocation0 [shape = 'u32[]', space=smem, size = 0x4, offset = 0x4, fixed_abs, tag = 'smem constant byte address 0x4 - core index']
  #allocation1 [shape = 'u32[144,128]{1,0:T(1,128)}', space=vmem, size = 0x12000, scoped, tag = 'internal scratch']
  %s0 = inlined_call_operand.vmem [shape: f32[10,256], index: 0, kind: input, shape index: {}]
  %s1 = inlined_call_operand.vmem [shape: f32[256,128], index: 1, kind: input, shape index: {}]
  %s2 = inlined_call_operand.vmem [shape: f32[1,128], index: 2, kind: input, shape index: {}]
  %s3 = inlined_call_operand.vmem [shape: f32[32,128], index: 3, kind: input, shape index: {}]
  %s4 = inlined_call_operand.vmem [shape: f32[32,1152], index: 4, kind: input, shape index: {}]
  %s5 = inlined_call_operand.vmem [shape: f32[1,1152], index: 5, kind: input, shape index: {}]
  %s6 = inlined_call_operand.vmem [shape: f32[2,1152], index: 6, kind: output, shape index: {}]
  %s7 = sld [smem:[#allocation0]]
  $region34: #{conv_lstm_vit_forward.1} parent=0
    _
  %s9 = ssub.s32 1, %s7
  %s10 = scalar_select 0, %s9, %s7
  // Predicated region
  $region2: #{conv_lstm_vit_forward.1} parent=0 // pred_check
    _
  $region3: #{conv_lstm_vit_forward.1} parent=0 // pred_check_branch
    %12 = sbr.rel (0) target = $region5
  $region4: #{conv_lstm_vit_forward.1} parent=0 // pred_region
    _
  $region5: #{conv_lstm_vit_forward.1} parent=0 // pred_fallthru
    _
  // Predicated region
  $region6: #{conv_lstm_vit_forward.1} parent=0 // pred_check
    _
  $region7: #{conv_lstm_vit_forward.1} parent=0 // pred_check_branch
    %14 = sbr.rel (0) target = $region9
  $region8: #{conv_lstm_vit_forward.1} parent=0 // pred_region
    _
  $region9: #{conv_lstm_vit_forward.1} parent=0 // pred_fallthru
    _
  // Predicated region
  $region10: #{conv_lstm_vit_forward.1} parent=0 // pred_check
    _
  $region11: #{conv_lstm_vit_forward.1} parent=0 // pred_check_branch
    %16 = sbr.rel (0) target = $region13
  $region12: #{conv_lstm_vit_forward.1} parent=0 // pred_region
    _
  $region13: #{conv_lstm_vit_forward.1} parent=0 // pred_fallthru
    _
  // Predicated region
  $region14: #{conv_lstm_vit_forward.1} parent=0 // pred_check
    _
  $region15: #{conv_lstm_vit_forward.1} parent=0 // pred_check_branch
    %18 = sbr.rel (0) target = $region17
  $region16: #{conv_lstm_vit_forward.1} parent=0 // pred_region
    _
  $region17: #{conv_lstm_vit_forward.1} parent=0 // pred_fallthru
    _
  // Predicated region
  $region18: #{conv_lstm_vit_forward.1} parent=0 // pred_check
    _
  $region19: #{conv_lstm_vit_forward.1} parent=0 // pred_check_branch
    %20 = sbr.rel (0) target = $region21
  $region20: #{conv_lstm_vit_forward.1} parent=0 // pred_region
    _
  $region21: #{conv_lstm_vit_forward.1} parent=0 // pred_fallthru
    _
  // Predicated region
  $region22: #{conv_lstm_vit_forward.1} parent=0 // pred_check
    _
  $region23: #{conv_lstm_vit_forward.1} parent=0 // pred_check_branch
    %22 = sbr.rel (0) target = $region25
  $region24: #{conv_lstm_vit_forward.1} parent=0 // pred_region
    _
  $region25: #{conv_lstm_vit_forward.1} parent=0 // pred_fallthru
    _
  %v23 = vld [vmem:[%s0] sm:$0xff]
  %v24 = vld [vmem:[%s0 + $0x8] sm:$0xff]
  %v25 = vld [vmem:[%s0 + $0x10] sm:$0x3]
  %v26 = vld [vmem:[%s0 + $0x18] sm:$0x3]
  %v27 = vld [vmem:[%s1] sm:$0xff]
  %v28 = vld [vmem:[%s1 + $0x8] sm:$0xff]
  %v29 = vld [vmem:[%s1 + $0x10] sm:$0xff]
  %v30 = vld [vmem:[%s1 + $0x18] sm:$0xff]
  %v31 = vld [vmem:[%s1 + $0x20] sm:$0xff]
  %v32 = vld [vmem:[%s1 + $0x28] sm:$0xff]
  %v33 = vld [vmem:[%s1 + $0x30] sm:$0xff]
  %v34 = vld [vmem:[%s1 + $0x38] sm:$0xff]
  %v35 = vld [vmem:[%s1 + $0x40] sm:$0xff]
  %v36 = vld [vmem:[%s1 + $0x48] sm:$0xff]
  %v37 = vld [vmem:[%s1 + $0x50] sm:$0xff]
  %v38 = vld [vmem:[%s1 + $0x58] sm:$0xff]
  %v39 = vld [vmem:[%s1 + $0x60] sm:$0xff]
  %v40 = vld [vmem:[%s1 + $0x68] sm:$0xff]
  %v41 = vld [vmem:[%s1 + $0x70] sm:$0xff]
  %v42 = vld [vmem:[%s1 + $0x78] sm:$0xff]
  %v43 = vld [vmem:[%s1 + $0x80] sm:$0xff]
  %v44 = vld [vmem:[%s1 + $0x88] sm:$0xff]
  %v45 = vld [vmem:[%s1 + $0x90] sm:$0xff]
  %v46 = vld [vmem:[%s1 + $0x98] sm:$0xff]
  %v47 = vld [vmem:[%s1 + $0xa0] sm:$0xff]
  %v48 = vld [vmem:[%s1 + $0xa8] sm:$0xff]
  %v49 = vld [vmem:[%s1 + $0xb0] sm:$0xff]
  %v50 = vld [vmem:[%s1 + $0xb8] sm:$0xff]
  %v51 = vld [vmem:[%s1 + $0xc0] sm:$0xff]
  %v52 = vld [vmem:[%s1 + $0xc8] sm:$0xff]
  %v53 = vld [vmem:[%s1 + $0xd0] sm:$0xff]
  %v54 = vld [vmem:[%s1 + $0xd8] sm:$0xff]
  %v55 = vld [vmem:[%s1 + $0xe0] sm:$0xff]
  %v56 = vld [vmem:[%s1 + $0xe8] sm:$0xff]
  %v57 = vld [vmem:[%s1 + $0xf0] sm:$0xff]
  %v58 = vld [vmem:[%s1 + $0xf8] sm:$0xff]
  %v59 = vld [vmem:[%s2] sm:$0x1]
  %v61 = vlaneseq
  %v62 = vshrl.u32 %v61, 7
  %v63 = vsub.s32 0, %v62
  %v64 = vrot.slane %v59, %v63
  %66 = vmatprep.subr.mxu0 0.0
  %67 = vmatpush1.msra.mxu0 %v27
  %68 = vmatprep.subr.mxu0 0.0
  %69 = vmatpush1.msra.mxu0 %v28
  %70 = vmatprep.subr.mxu0 0.0
  %71 = vmatpush1.msra.mxu0 %v29
  %72 = vmatprep.subr.mxu0 0.0
  %73 = vmatpush1.msra.mxu0 %v30
  %74 = vmatprep.subr.mxu0 0.0
  %75 = vmatpush1.msra.mxu0 %v31
  %76 = vmatprep.subr.mxu0 0.0
  %77 = vmatpush1.msra.mxu0 %v32
  %78 = vmatprep.subr.mxu0 0.0
  %79 = vmatpush1.msra.mxu0 %v33
  %80 = vmatprep.subr.mxu0 0.0
  %81 = vmatpush1.msra.mxu0 %v34
  %82 = vmatprep.subr.mxu0 0.0
  %83 = vmatpush1.msra.mxu0 %v35
  %84 = vmatprep.subr.mxu0 0.0
  %85 = vmatpush1.msra.mxu0 %v36
  %86 = vmatprep.subr.mxu0 0.0
  %87 = vmatpush1.msra.mxu0 %v37
  %88 = vmatprep.subr.mxu0 0.0
  %89 = vmatpush1.msra.mxu0 %v38
  %90 = vmatprep.subr.mxu0 0.0
  %91 = vmatpush1.msra.mxu0 %v39
  %92 = vmatprep.subr.mxu0 0.0
  %93 = vmatpush1.msra.mxu0 %v40
  %94 = vmatprep.subr.mxu0 0.0
  %95 = vmatpush1.msra.mxu0 %v41
  %96 = vmatprep.subr.mxu0 0.0
  %97 = vmatpush1.msra.mxu0 %v42
  %98 = vmatprep.subr.mxu0 0.0
  %99 = vmatpush1.msra.mxu0 %v43
  %100 = vmatprep.subr.mxu0 0.0
  %101 = vmatpush1.msra.mxu0 %v44
  %102 = vmatprep.subr.mxu0 0.0
  %103 = vmatpush1.msra.mxu0 %v45
  %104 = vmatprep.subr.mxu0 0.0
  %105 = vmatpush1.msra.mxu0 %v46
  %106 = vmatprep.subr.mxu0 0.0
  %107 = vmatpush1.msra.mxu0 %v47
  %108 = vmatprep.subr.mxu0 0.0
  %109 = vmatpush1.msra.mxu0 %v48
  %110 = vmatprep.subr.mxu0 0.0
  %111 = vmatpush1.msra.mxu0 %v49
  %112 = vmatprep.subr.mxu0 0.0
  %113 = vmatpush1.msra.mxu0 %v50
  %114 = vmatprep.subr.mxu0 0.0
  %115 = vmatpush1.msra.mxu0 %v51
  %116 = vmatprep.subr.mxu0 0.0
  %117 = vmatpush1.msra.mxu0 %v52
  %118 = vmatprep.subr.mxu0 0.0
  %119 = vmatpush1.msra.mxu0 %v53
  %120 = vmatprep.subr.mxu0 0.0
  %121 = vmatpush1.msra.mxu0 %v54
  %122 = vmatprep.subr.mxu0 0.0
  %123 = vmatpush1.msra.mxu0 %v55
  %124 = vmatprep.subr.mxu0 0.0
  %125 = vmatpush1.msra.mxu0 %v56
  %126 = vmatprep.subr.mxu0 0.0
  %127 = vmatpush1.msra.mxu0 %v57
  %128 = vmatprep.subr.mxu0 0.0
  %129 = vmatpush1.msra.mxu0 %v58
  %130 = vmatprep.mubr.f32.mxu0 %v24
  %131 = vmatmul.mubr.f32.gmra.mrb[0].mxu0 %v23
  %v132 = vpop.f32.mrb[0].mxu0
  %v133 = vadd.f32 %v64, %v132
  %v134 = vpop.f32.mrb[0].mxu0
  %135 = vmatprep.mubr.f32.mxu0 %v26
  %136 = vmatmul.mubr.f32.gmra.mrb[0].mxu0 %v25
  %v137 = vpop.f32.mrb[0].mxu0
  %v138 = vadd.f32 %v64, %v137
  %v139 = vpop.f32.mrb[0].mxu0
  %140 = vdwg.mxu0
  %v141 = vld [vmem:[%s3] sm:$0xff]
  %v142 = vld [vmem:[%s3 + $0x8] sm:$0xff]
  %v143 = vld [vmem:[%s3 + $0x10] sm:$0xff]
  %v144 = vld [vmem:[%s3 + $0x18] sm:$0xff]
  %vm145 = vcmask 261120
  %v147 = vsel %vm145, 0.0, 0
  %149 = vmatprep.subr.mxu0 0.0
  %150 = vmatpush1.msra.mxu0 %v141
  %151 = vmatprep.subr.mxu0 0.0
  %152 = vmatpush1.msra.mxu0 %v142
  %153 = vmatprep.subr.mxu0 0.0
  %154 = vmatpush1.msra.mxu0 %v143
  %155 = vmatprep.subr.mxu0 0.0
  %156 = vmatpush1.msra.mxu0 %v144
  %157 = vmatprep.subr.mxu0 0.0
  %158 = vmatpush1.msra.mxu0 0.0
  %159 = vmatprep.subr.mxu0 0.0
  %160 = vmatpush1.msra.mxu0 0.0
  %161 = vmatprep.subr.mxu0 0.0
  %162 = vmatpush1.msra.mxu0 0.0
  %163 = vmatprep.subr.mxu0 0.0
  %164 = vmatpush1.msra.mxu0 0.0
  %165 = vmatprep.subr.mxu0 0.0
  %166 = vmatpush1.msra.mxu0 0.0
  %167 = vmatprep.subr.mxu0 0.0
  %168 = vmatpush1.msra.mxu0 0.0
  %169 = vmatprep.subr.mxu0 0.0
  %170 = vmatpush1.msra.mxu0 0.0
  %171 = vmatprep.subr.mxu0 0.0
  %172 = vmatpush1.msra.mxu0 0.0
  %173 = vmatprep.subr.mxu0 0.0
  %174 = vmatpush1.msra.mxu0 0.0
  %175 = vmatprep.subr.mxu0 0.0
  %176 = vmatpush1.msra.mxu0 0.0
  %177 = vmatprep.subr.mxu0 0.0
  %178 = vmatpush1.msra.mxu0 0.0
  %179 = vmatprep.subr.mxu0 0.0
  %180 = vmatpush1.msra.mxu0 0.0
  %181 = vmatprep.subr.mxu0 0.0
  %182 = vmatpush1.msra.mxu0 0.0
  %183 = vmatprep.subr.mxu0 0.0
  %184 = vmatpush1.msra.mxu0 0.0
  %185 = vmatprep.subr.mxu0 0.0
  %186 = vmatpush1.msra.mxu0 0.0
  %187 = vmatprep.subr.mxu0 0.0
  %188 = vmatpush1.msra.mxu0 0.0
  %189 = vmatprep.subr.mxu0 0.0
  %190 = vmatpush1.msra.mxu0 0.0
  %191 = vmatprep.subr.mxu0 0.0
  %192 = vmatpush1.msra.mxu0 0.0
  %193 = vmatprep.subr.mxu0 0.0
  %194 = vmatpush1.msra.mxu0 0.0
  %195 = vmatprep.subr.mxu0 0.0
  %196 = vmatpush1.msra.mxu0 0.0
  %197 = vmatprep.subr.mxu0 0.0
  %198 = vmatpush1.msra.mxu0 0.0
  %199 = vmatprep.subr.mxu0 0.0
  %200 = vmatpush1.msra.mxu0 0.0
  %201 = vmatprep.subr.mxu0 0.0
  %202 = vmatpush1.msra.mxu0 0.0
  %203 = vmatprep.subr.mxu0 0.0
  %204 = vmatpush1.msra.mxu0 0.0
  %205 = vmatprep.subr.mxu0 0.0
  %206 = vmatpush1.msra.mxu0 0.0
  %207 = vmatprep.subr.mxu0 0.0
  %208 = vmatpush1.msra.mxu0 0.0
  %209 = vmatprep.subr.mxu0 0.0
  %210 = vmatpush1.msra.mxu0 0.0
  %211 = vmatprep.subr.mxu0 0.0
  %212 = vmatpush1.msra.mxu0 0.0
  %213 = vmatprep.mubr.f32.mxu0 0.0
  %214 = vmatmul.mubr.f32.gmra.mrb[0].mxu0 %v147
  %v215 = vpop.f32.mrb[0].mxu0
  %v216 = vadd.f32 0.0, %v215
  %v217 = vpop.f32.mrb[0].mxu0
  %218 = vdwg.mxu0
  %v219 = vadd.f32 %v133, %v216
  %v220 = vxor.u32 %v219, 2147483648
  %v221 = vmul.f32 %v220, 1.442695
  %v222 = vpow.pop %v221
  %v223 = vadd.f32 %v222, 1.0
  %v224 = vrcp.pop %v223
  %v225 = vmul.f32 1.0, %v224
  %v226 = vtanh.pop %v219
  %v227 = vmul.f32 %v225, 0.0
  %229 = vrot.lane.b32.xlu0 %v226, 64
  %v230 = vpop.permute.xlu0 %229
  %v232 = vmul.f32 %v225, %v230
  %234 = vrot.lane.b32.xlu0 %v232, 32
  %v235 = vpop.permute.xlu0 %234
  %v237 = vadd.f32 %v227, %v235
  %v238 = vtanh.pop %v237
  %240 = vrot.lane.b32.xlu0 %v238, 64
  %v241 = vpop.permute.xlu0 %240
  %v243 = vmul.f32 %v225, %v241
  %245 = vrot.lane.b32.xlu0 %v243, 32
  %v246 = vpop.permute.xlu0 %245
  %v247 = vsel %vm145, %v246, 0
  %249 = vmatprep.subr.mxu0 0.0
  %250 = vmatpush1.msra.mxu0 %v141
  %251 = vmatprep.subr.mxu0 0.0
  %252 = vmatpush1.msra.mxu0 %v142
  %253 = vmatprep.subr.mxu0 0.0
  %254 = vmatpush1.msra.mxu0 %v143
  %255 = vmatprep.subr.mxu0 0.0
  %256 = vmatpush1.msra.mxu0 %v144
  %257 = vmatprep.subr.mxu0 0.0
  %258 = vmatpush1.msra.mxu0 0.0
  %259 = vmatprep.subr.mxu0 0.0
  %260 = vmatpush1.msra.mxu0 0.0
  %261 = vmatprep.subr.mxu0 0.0
  %262 = vmatpush1.msra.mxu0 0.0
  %263 = vmatprep.subr.mxu0 0.0
  %264 = vmatpush1.msra.mxu0 0.0
  %265 = vmatprep.subr.mxu0 0.0
  %266 = vmatpush1.msra.mxu0 0.0
  %267 = vmatprep.subr.mxu0 0.0
  %268 = vmatpush1.msra.mxu0 0.0
  %269 = vmatprep.subr.mxu0 0.0
  %270 = vmatpush1.msra.mxu0 0.0
  %271 = vmatprep.subr.mxu0 0.0
  %272 = vmatpush1.msra.mxu0 0.0
  %273 = vmatprep.subr.mxu0 0.0
  %274 = vmatpush1.msra.mxu0 0.0
  %275 = vmatprep.subr.mxu0 0.0
  %276 = vmatpush1.msra.mxu0 0.0
  %277 = vmatprep.subr.mxu0 0.0
  %278 = vmatpush1.msra.mxu0 0.0
  %279 = vmatprep.subr.mxu0 0.0
  %280 = vmatpush1.msra.mxu0 0.0
  %281 = vmatprep.subr.mxu0 0.0
  %282 = vmatpush1.msra.mxu0 0.0
  %283 = vmatprep.subr.mxu0 0.0
  %284 = vmatpush1.msra.mxu0 0.0
  %285 = vmatprep.subr.mxu0 0.0
  %286 = vmatpush1.msra.mxu0 0.0
  %287 = vmatprep.subr.mxu0 0.0
  %288 = vmatpush1.msra.mxu0 0.0
  %289 = vmatprep.subr.mxu0 0.0
  %290 = vmatpush1.msra.mxu0 0.0
  %291 = vmatprep.subr.mxu0 0.0
  %292 = vmatpush1.msra.mxu0 0.0
  %293 = vmatprep.subr.mxu0 0.0
  %294 = vmatpush1.msra.mxu0 0.0
  %295 = vmatprep.subr.mxu0 0.0
  %296 = vmatpush1.msra.mxu0 0.0
  %297 = vmatprep.subr.mxu0 0.0
  %298 = vmatpush1.msra.mxu0 0.0
  %299 = vmatprep.subr.mxu0 0.0
  %300 = vmatpush1.msra.mxu0 0.0
  %301 = vmatprep.subr.mxu0 0.0
  %302 = vmatpush1.msra.mxu0 0.0
  %303 = vmatprep.subr.mxu0 0.0
  %304 = vmatpush1.msra.mxu0 0.0
  %305 = vmatprep.subr.mxu0 0.0
  %306 = vmatpush1.msra.mxu0 0.0
  %307 = vmatprep.subr.mxu0 0.0
  %308 = vmatpush1.msra.mxu0 0.0
  %309 = vmatprep.subr.mxu0 0.0
  %310 = vmatpush1.msra.mxu0 0.0
  %311 = vmatprep.subr.mxu0 0.0
  %312 = vmatpush1.msra.mxu0 0.0
  %313 = vmatprep.mubr.f32.mxu0 0.0
  %314 = vmatmul.mubr.f32.gmra.mrb[0].mxu0 %v247
  %v315 = vpop.f32.mrb[0].mxu0
  %v316 = vadd.f32 0.0, %v315
  %v317 = vpop.f32.mrb[0].mxu0
  %318 = vdwg.mxu0
  %v320 = vrot.slane %v316, 6
  %v322 = vadd.f32 %v133, %v320
  %v323 = vxor.u32 %v322, 2147483648
  %v324 = vmul.f32 %v323, 1.442695
  %v325 = vpow.pop %v324
  %v326 = vadd.f32 %v325, 1.0
  %v327 = vrcp.pop %v326
  %v328 = vmul.f32 1.0, %v327
  %v329 = vtanh.pop %v322
  %v331 = vrot.slane %v237, 6
  %v333 = vmul.f32 %v328, %v331
  %335 = vrot.lane.b32.xlu0 %v329, 64
  %v336 = vpop.permute.xlu0 %335
  %v338 = vmul.f32 %v328, %v336
  %340 = vrot.lane.b32.xlu0 %v338, 32
  %v341 = vpop.permute.xlu0 %340
  %v343 = vadd.f32 %v333, %v341
  %v344 = vtanh.pop %v343
  %346 = vrot.lane.b32.xlu0 %v344, 64
  %v347 = vpop.permute.xlu0 %346
  %v349 = vmul.f32 %v328, %v347
  %v351 = vrot.slane %v349, 2
  %352 = vrot.lane.b32.xlu0 %v351, 32
  %v353 = vpop.permute.xlu0 %352
  %v354 = vsel %vm145, %v353, 0
  %356 = vmatprep.subr.mxu0 0.0
  %357 = vmatpush1.msra.mxu0 %v141
  %358 = vmatprep.subr.mxu0 0.0
  %359 = vmatpush1.msra.mxu0 %v142
  %360 = vmatprep.subr.mxu0 0.0
  %361 = vmatpush1.msra.mxu0 %v143
  %362 = vmatprep.subr.mxu0 0.0
  %363 = vmatpush1.msra.mxu0 %v144
  %364 = vmatprep.subr.mxu0 0.0
  %365 = vmatpush1.msra.mxu0 0.0
  %366 = vmatprep.subr.mxu0 0.0
  %367 = vmatpush1.msra.mxu0 0.0
  %368 = vmatprep.subr.mxu0 0.0
  %369 = vmatpush1.msra.mxu0 0.0
  %370 = vmatprep.subr.mxu0 0.0
  %371 = vmatpush1.msra.mxu0 0.0
  %372 = vmatprep.subr.mxu0 0.0
  %373 = vmatpush1.msra.mxu0 0.0
  %374 = vmatprep.subr.mxu0 0.0
  %375 = vmatpush1.msra.mxu0 0.0
  %376 = vmatprep.subr.mxu0 0.0
  %377 = vmatpush1.msra.mxu0 0.0
  %378 = vmatprep.subr.mxu0 0.0
  %379 = vmatpush1.msra.mxu0 0.0
  %380 = vmatprep.subr.mxu0 0.0
  %381 = vmatpush1.msra.mxu0 0.0
  %382 = vmatprep.subr.mxu0 0.0
  %383 = vmatpush1.msra.mxu0 0.0
  %384 = vmatprep.subr.mxu0 0.0
  %385 = vmatpush1.msra.mxu0 0.0
  %386 = vmatprep.subr.mxu0 0.0
  %387 = vmatpush1.msra.mxu0 0.0
  %388 = vmatprep.subr.mxu0 0.0
  %389 = vmatpush1.msra.mxu0 0.0
  %390 = vmatprep.subr.mxu0 0.0
  %391 = vmatpush1.msra.mxu0 0.0
  %392 = vmatprep.subr.mxu0 0.0
  %393 = vmatpush1.msra.mxu0 0.0
  %394 = vmatprep.subr.mxu0 0.0
  %395 = vmatpush1.msra.mxu0 0.0
  %396 = vmatprep.subr.mxu0 0.0
  %397 = vmatpush1.msra.mxu0 0.0
  %398 = vmatprep.subr.mxu0 0.0
  %399 = vmatpush1.msra.mxu0 0.0
  %400 = vmatprep.subr.mxu0 0.0
  %401 = vmatpush1.msra.mxu0 0.0
  %402 = vmatprep.subr.mxu0 0.0
  %403 = vmatpush1.msra.mxu0 0.0
  %404 = vmatprep.subr.mxu0 0.0
  %405 = vmatpush1.msra.mxu0 0.0
  %406 = vmatprep.subr.mxu0 0.0
  %407 = vmatpush1.msra.mxu0 0.0
  %408 = vmatprep.subr.mxu0 0.0
  %409 = vmatpush1.msra.mxu0 0.0
  %410 = vmatprep.subr.mxu0 0.0
  %411 = vmatpush1.msra.mxu0 0.0
  %412 = vmatprep.subr.mxu0 0.0
  %413 = vmatpush1.msra.mxu0 0.0
  %414 = vmatprep.subr.mxu0 0.0
  %415 = vmatpush1.msra.mxu0 0.0
  %416 = vmatprep.subr.mxu0 0.0
  %417 = vmatpush1.msra.mxu0 0.0
  %418 = vmatprep.subr.mxu0 0.0
  %419 = vmatpush1.msra.mxu0 0.0
  %420 = vmatprep.mubr.f32.mxu0 0.0
  %421 = vmatmul.mubr.f32.gmra.mrb[0].mxu0 %v354
  %v422 = vpop.f32.mrb[0].mxu0
  %v423 = vadd.f32 0.0, %v422
  %v424 = vpop.f32.mrb[0].mxu0
  %425 = vdwg.mxu0
  %v427 = vrot.slane %v423, 4
  %v429 = vadd.f32 %v133, %v427
  %v430 = vxor.u32 %v429, 2147483648
  %v431 = vmul.f32 %v430, 1.442695
  %v432 = vpow.pop %v431
  %v433 = vadd.f32 %v432, 1.0
  %v434 = vrcp.pop %v433
  %v435 = vmul.f32 1.0, %v434
  %v436 = vtanh.pop %v429
  %v438 = vrot.slane %v343, 6
  %v440 = vmul.f32 %v435, %v438
  %442 = vrot.lane.b32.xlu0 %v436, 64
  %v443 = vpop.permute.xlu0 %442
  %v445 = vmul.f32 %v435, %v443
  %447 = vrot.lane.b32.xlu0 %v445, 32
  %v448 = vpop.permute.xlu0 %447
  %v450 = vadd.f32 %v440, %v448
  %v451 = vtanh.pop %v450
  %453 = vrot.lane.b32.xlu0 %v451, 64
  %v454 = vpop.permute.xlu0 %453
  %v456 = vmul.f32 %v435, %v454
  %v458 = vrot.slane %v456, 4
  %459 = vrot.lane.b32.xlu0 %v458, 32
  %v460 = vpop.permute.xlu0 %459
  %v461 = vsel %vm145, %v460, 0
  %463 = vmatprep.subr.mxu0 0.0
  %464 = vmatpush1.msra.mxu0 %v141
  %465 = vmatprep.subr.mxu0 0.0
  %466 = vmatpush1.msra.mxu0 %v142
  %467 = vmatprep.subr.mxu0 0.0
  %468 = vmatpush1.msra.mxu0 %v143
  %469 = vmatprep.subr.mxu0 0.0
  %470 = vmatpush1.msra.mxu0 %v144
  %471 = vmatprep.subr.mxu0 0.0
  %472 = vmatpush1.msra.mxu0 0.0
  %473 = vmatprep.subr.mxu0 0.0
  %474 = vmatpush1.msra.mxu0 0.0
  %475 = vmatprep.subr.mxu0 0.0
  %476 = vmatpush1.msra.mxu0 0.0
  %477 = vmatprep.subr.mxu0 0.0
  %478 = vmatpush1.msra.mxu0 0.0
  %479 = vmatprep.subr.mxu0 0.0
  %480 = vmatpush1.msra.mxu0 0.0
  %481 = vmatprep.subr.mxu0 0.0
  %482 = vmatpush1.msra.mxu0 0.0
  %483 = vmatprep.subr.mxu0 0.0
  %484 = vmatpush1.msra.mxu0 0.0
  %485 = vmatprep.subr.mxu0 0.0
  %486 = vmatpush1.msra.mxu0 0.0
  %487 = vmatprep.subr.mxu0 0.0
  %488 = vmatpush1.msra.mxu0 0.0
  %489 = vmatprep.subr.mxu0 0.0
  %490 = vmatpush1.msra.mxu0 0.0
  %491 = vmatprep.subr.mxu0 0.0
  %492 = vmatpush1.msra.mxu0 0.0
  %493 = vmatprep.subr.mxu0 0.0
  %494 = vmatpush1.msra.mxu0 0.0
  %495 = vmatprep.subr.mxu0 0.0
  %496 = vmatpush1.msra.mxu0 0.0
  %497 = vmatprep.subr.mxu0 0.0
  %498 = vmatpush1.msra.mxu0 0.0
  %499 = vmatprep.subr.mxu0 0.0
  %500 = vmatpush1.msra.mxu0 0.0
  %501 = vmatprep.subr.mxu0 0.0
  %502 = vmatpush1.msra.mxu0 0.0
  %503 = vmatprep.subr.mxu0 0.0
  %504 = vmatpush1.msra.mxu0 0.0
  %505 = vmatprep.subr.mxu0 0.0
  %506 = vmatpush1.msra.mxu0 0.0
  %507 = vmatprep.subr.mxu0 0.0
  %508 = vmatpush1.msra.mxu0 0.0
  %509 = vmatprep.subr.mxu0 0.0
  %510 = vmatpush1.msra.mxu0 0.0
  %511 = vmatprep.subr.mxu0 0.0
  %512 = vmatpush1.msra.mxu0 0.0
  %513 = vmatprep.subr.mxu0 0.0
  %514 = vmatpush1.msra.mxu0 0.0
  %515 = vmatprep.subr.mxu0 0.0
  %516 = vmatpush1.msra.mxu0 0.0
  %517 = vmatprep.subr.mxu0 0.0
  %518 = vmatpush1.msra.mxu0 0.0
  %519 = vmatprep.subr.mxu0 0.0
  %520 = vmatpush1.msra.mxu0 0.0
  %521 = vmatprep.subr.mxu0 0.0
  %522 = vmatpush1.msra.mxu0 0.0
  %523 = vmatprep.subr.mxu0 0.0
  %524 = vmatpush1.msra.mxu0 0.0
  %525 = vmatprep.subr.mxu0 0.0
  %526 = vmatpush1.msra.mxu0 0.0
  %527 = vmatprep.mubr.f32.mxu0 0.0
  %528 = vmatmul.mubr.f32.gmra.mrb[0].mxu0 %v461
  %v529 = vpop.f32.mrb[0].mxu0
  %v530 = vadd.f32 0.0, %v529
  %v531 = vpop.f32.mrb[0].mxu0
  %532 = vdwg.mxu0
  %v534 = vrot.slane %v530, 2
  %v536 = vadd.f32 %v133, %v534
  %v537 = vxor.u32 %v536, 2147483648
  %v538 = vmul.f32 %v537, 1.442695
  %v539 = vpow.pop %v538
  %v540 = vadd.f32 %v539, 1.0
  %v541 = vrcp.pop %v540
  %v542 = vmul.f32 1.0, %v541
  %v543 = vtanh.pop %v536
  %v545 = vrot.slane %v450, 6
  %v547 = vmul.f32 %v542, %v545
  %549 = vrot.lane.b32.xlu0 %v543, 64
  %v550 = vpop.permute.xlu0 %549
  %v552 = vmul.f32 %v542, %v550
  %554 = vrot.lane.b32.xlu0 %v552, 32
  %v555 = vpop.permute.xlu0 %554
  %v557 = vadd.f32 %v547, %v555
  %v558 = vtanh.pop %v557
  %560 = vrot.lane.b32.xlu0 %v558, 64
  %v561 = vpop.permute.xlu0 %560
  %v563 = vmul.f32 %v542, %v561
  %v565 = vrot.slane %v563, 6
  %566 = vrot.lane.b32.xlu0 %v565, 32
  %v567 = vpop.permute.xlu0 %566
  %v568 = vsel %vm145, %v567, 0
  %570 = vmatprep.subr.mxu0 0.0
  %571 = vmatpush1.msra.mxu0 %v141
  %572 = vmatprep.subr.mxu0 0.0
  %573 = vmatpush1.msra.mxu0 %v142
  %574 = vmatprep.subr.mxu0 0.0
  %575 = vmatpush1.msra.mxu0 %v143
  %576 = vmatprep.subr.mxu0 0.0
  %577 = vmatpush1.msra.mxu0 %v144
  %578 = vmatprep.subr.mxu0 0.0
  %579 = vmatpush1.msra.mxu0 0.0
  %580 = vmatprep.subr.mxu0 0.0
  %581 = vmatpush1.msra.mxu0 0.0
  %582 = vmatprep.subr.mxu0 0.0
  %583 = vmatpush1.msra.mxu0 0.0
  %584 = vmatprep.subr.mxu0 0.0
  %585 = vmatpush1.msra.mxu0 0.0
  %586 = vmatprep.subr.mxu0 0.0
  %587 = vmatpush1.msra.mxu0 0.0
  %588 = vmatprep.subr.mxu0 0.0
  %589 = vmatpush1.msra.mxu0 0.0
  %590 = vmatprep.subr.mxu0 0.0
  %591 = vmatpush1.msra.mxu0 0.0
  %592 = vmatprep.subr.mxu0 0.0
  %593 = vmatpush1.msra.mxu0 0.0
  %594 = vmatprep.subr.mxu0 0.0
  %595 = vmatpush1.msra.mxu0 0.0
  %596 = vmatprep.subr.mxu0 0.0
  %597 = vmatpush1.msra.mxu0 0.0
  %598 = vmatprep.subr.mxu0 0.0
  %599 = vmatpush1.msra.mxu0 0.0
  %600 = vmatprep.subr.mxu0 0.0
  %601 = vmatpush1.msra.mxu0 0.0
  %602 = vmatprep.subr.mxu0 0.0
  %603 = vmatpush1.msra.mxu0 0.0
  %604 = vmatprep.subr.mxu0 0.0
  %605 = vmatpush1.msra.mxu0 0.0
  %606 = vmatprep.subr.mxu0 0.0
  %607 = vmatpush1.msra.mxu0 0.0
  %608 = vmatprep.subr.mxu0 0.0
  %609 = vmatpush1.msra.mxu0 0.0
  %610 = vmatprep.subr.mxu0 0.0
  %611 = vmatpush1.msra.mxu0 0.0
  %612 = vmatprep.subr.mxu0 0.0
  %613 = vmatpush1.msra.mxu0 0.0
  %614 = vmatprep.subr.mxu0 0.0
  %615 = vmatpush1.msra.mxu0 0.0
  %616 = vmatprep.subr.mxu0 0.0
  %617 = vmatpush1.msra.mxu0 0.0
  %618 = vmatprep.subr.mxu0 0.0
  %619 = vmatpush1.msra.mxu0 0.0
  %620 = vmatprep.subr.mxu0 0.0
  %621 = vmatpush1.msra.mxu0 0.0
  %622 = vmatprep.subr.mxu0 0.0
  %623 = vmatpush1.msra.mxu0 0.0
  %624 = vmatprep.subr.mxu0 0.0
  %625 = vmatpush1.msra.mxu0 0.0
  %626 = vmatprep.subr.mxu0 0.0
  %627 = vmatpush1.msra.mxu0 0.0
  %628 = vmatprep.subr.mxu0 0.0
  %629 = vmatpush1.msra.mxu0 0.0
  %630 = vmatprep.subr.mxu0 0.0
  %631 = vmatpush1.msra.mxu0 0.0
  %632 = vmatprep.subr.mxu0 0.0
  %633 = vmatpush1.msra.mxu0 0.0
  %634 = vmatprep.mubr.f32.mxu0 0.0
  %635 = vmatmul.mubr.f32.gmra.mrb[0].mxu0 %v568
  %v636 = vpop.f32.mrb[0].mxu0
  %v637 = vadd.f32 0.0, %v636
  %v638 = vpop.f32.mrb[0].mxu0
  %639 = vdwg.mxu0
  %v640 = vadd.f32 %v138, %v637
  %v641 = vxor.u32 %v640, 2147483648
  %v642 = vmul.f32 %v641, 1.442695
  %v643 = vpow.pop %v642
  %v644 = vadd.f32 %v643, 1.0
  %v645 = vrcp.pop %v644
  %v646 = vmul.f32 1.0, %v645
  %v647 = vtanh.pop %v640
  %v649 = vrot.slane %v557, 6
  %v651 = vmul.f32 %v646, %v649
  %653 = vrot.lane.b32.xlu0 %v647, 64
  %v654 = vpop.permute.xlu0 %653
  %v656 = vmul.f32 %v646, %v654
  %658 = vrot.lane.b32.xlu0 %v656, 32
  %v659 = vpop.permute.xlu0 %658
  %v661 = vadd.f32 %v651, %v659
  %v662 = vtanh.pop %v661
  %664 = vrot.lane.b32.xlu0 %v662, 64
  %v665 = vpop.permute.xlu0 %664
  %v667 = vmul.f32 %v646, %v665
  %v668 = vld [vmem:[%s4] sm:$0xff]
  %v669 = vld [vmem:[%s4 + $0x8] sm:$0xff]
  %v670 = vld [vmem:[%s4 + $0x10] sm:$0xff]
  %v671 = vld [vmem:[%s4 + $0x18] sm:$0xff]
  %v672 = vld [vmem:[%s4 + $0x20] sm:$0xff]
  %v673 = vld [vmem:[%s4 + $0x28] sm:$0xff]
  %v674 = vld [vmem:[%s4 + $0x30] sm:$0xff]
  %v675 = vld [vmem:[%s4 + $0x38] sm:$0xff]
  %v676 = vld [vmem:[%s4 + $0x40] sm:$0xff]
  %v677 = vld [vmem:[%s4 + $0x48] sm:$0xff]
  %v678 = vld [vmem:[%s4 + $0x50] sm:$0xff]
  %v679 = vld [vmem:[%s4 + $0x58] sm:$0xff]
  %v680 = vld [vmem:[%s4 + $0x60] sm:$0xff]
  %v681 = vld [vmem:[%s4 + $0x68] sm:$0xff]
  %v682 = vld [vmem:[%s4 + $0x70] sm:$0xff]
  %v683 = vld [vmem:[%s4 + $0x78] sm:$0xff]
  %v684 = vld [vmem:[%s4 + $0x80] sm:$0xff]
  %v685 = vld [vmem:[%s4 + $0x88] sm:$0xff]
  %v686 = vld [vmem:[%s4 + $0x90] sm:$0xff]
  %v687 = vld [vmem:[%s4 + $0x98] sm:$0xff]
  %v688 = vld [vmem:[%s4 + $0xa0] sm:$0xff]
  %v689 = vld [vmem:[%s4 + $0xa8] sm:$0xff]
  %v690 = vld [vmem:[%s4 + $0xb0] sm:$0xff]
  %v691 = vld [vmem:[%s4 + $0xb8] sm:$0xff]
  %v692 = vld [vmem:[%s4 + $0xc0] sm:$0xff]
  %v693 = vld [vmem:[%s4 + $0xc8] sm:$0xff]
  %v694 = vld [vmem:[%s4 + $0xd0] sm:$0xff]
  %v695 = vld [vmem:[%s4 + $0xd8] sm:$0xff]
  %v696 = vld [vmem:[%s4 + $0xe0] sm:$0xff]
  %v697 = vld [vmem:[%s4 + $0xe8] sm:$0xff]
  %v698 = vld [vmem:[%s4 + $0xf0] sm:$0xff]
  %v699 = vld [vmem:[%s4 + $0xf8] sm:$0xff]
  %v700 = vld [vmem:[%s4 + $0x100] sm:$0xff]
  %v701 = vld [vmem:[%s4 + $0x108] sm:$0xff]
  %v702 = vld [vmem:[%s4 + $0x110] sm:$0xff]
  %v703 = vld [vmem:[%s4 + $0x118] sm:$0xff]
  %v704 = vld [vmem:[%s5] sm:$0xff]
  %v705 = vld [vmem:[%s5 + $0x8] sm:$0x1]
  %v708 = vlaneseq
  %v709 = vshrl.u32 %v708, 7
  %v710 = vsub.s32 0, %v709
  %v711 = vrot.slane %v704, %v710
  %v712 = vlaneseq
  %v713 = vshrl.u32 %v712, 7
  %v714 = vsub.s32 1, %v713
  %v715 = vrot.slane %v704, %v714
  %v716 = vlaneseq
  %v717 = vshrl.u32 %v716, 7
  %v718 = vsub.s32 2, %v717
  %v719 = vrot.slane %v704, %v718
  %v720 = vlaneseq
  %v721 = vshrl.u32 %v720, 7
  %v722 = vsub.s32 3, %v721
  %v723 = vrot.slane %v704, %v722
  %v724 = vlaneseq
  %v725 = vshrl.u32 %v724, 7
  %v726 = vsub.s32 4, %v725
  %v727 = vrot.slane %v704, %v726
  %v728 = vlaneseq
  %v729 = vshrl.u32 %v728, 7
  %v730 = vsub.s32 5, %v729
  %v731 = vrot.slane %v704, %v730
  %v732 = vlaneseq
  %v733 = vshrl.u32 %v732, 7
  %v734 = vsub.s32 6, %v733
  %v735 = vrot.slane %v704, %v734
  %v736 = vlaneseq
  %v737 = vshrl.u32 %v736, 7
  %v738 = vsub.s32 7, %v737
  %v739 = vrot.slane %v704, %v738
  %v740 = vlaneseq
  %v741 = vshrl.u32 %v740, 7
  %v742 = vsub.s32 0, %v741
  %v743 = vrot.slane %v705, %v742
  %754 = vrot.lane.b32.xlu0 %v667, 32
  %v755 = vpop.permute.xlu0 %754
  %v756 = vsel %vm145, %v755, 0
  %758 = vmatprep.subr.mxu0 %v669
  %759 = vmatpush1.msra.mxu0 %v668
  %760 = vmatprep.subr.mxu0 %v678
  %761 = vmatpush1.msra.mxu0 %v677
  %762 = vmatprep.subr.mxu0 %v687
  %763 = vmatpush1.msra.mxu0 %v686
  %764 = vmatprep.subr.mxu0 %v696
  %765 = vmatpush1.msra.mxu0 %v695
  %766 = vmatprep.subr.mxu0 0.0
  %767 = vmatpush1.msra.mxu0 0.0
  %768 = vmatprep.subr.mxu0 0.0
  %769 = vmatpush1.msra.mxu0 0.0
  %770 = vmatprep.subr.mxu0 0.0
  %771 = vmatpush1.msra.mxu0 0.0
  %772 = vmatprep.subr.mxu0 0.0
  %773 = vmatpush1.msra.mxu0 0.0
  %774 = vmatprep.subr.mxu0 0.0
  %775 = vmatpush1.msra.mxu0 0.0
  %776 = vmatprep.subr.mxu0 0.0
  %777 = vmatpush1.msra.mxu0 0.0
  %778 = vmatprep.subr.mxu0 0.0
  %779 = vmatpush1.msra.mxu0 0.0
  %780 = vmatprep.subr.mxu0 0.0
  %781 = vmatpush1.msra.mxu0 0.0
  %782 = vmatprep.subr.mxu0 0.0
  %783 = vmatpush1.msra.mxu0 0.0
  %784 = vmatprep.subr.mxu0 0.0
  %785 = vmatpush1.msra.mxu0 0.0
  %786 = vmatprep.subr.mxu0 0.0
  %787 = vmatpush1.msra.mxu0 0.0
  %788 = vmatprep.subr.mxu0 0.0
  %789 = vmatpush1.msra.mxu0 0.0
  %790 = vmatprep.subr.mxu0 0.0
  %791 = vmatpush1.msra.mxu0 0.0
  %792 = vmatprep.subr.mxu0 0.0
  %793 = vmatpush1.msra.mxu0 0.0
  %794 = vmatprep.subr.mxu0 0.0
  %795 = vmatpush1.msra.mxu0 0.0
  %796 = vmatprep.subr.mxu0 0.0
  %797 = vmatpush1.msra.mxu0 0.0
  %798 = vmatprep.subr.mxu0 0.0
  %799 = vmatpush1.msra.mxu0 0.0
  %800 = vmatprep.subr.mxu0 0.0
  %801 = vmatpush1.msra.mxu0 0.0
  %802 = vmatprep.subr.mxu0 0.0
  %803 = vmatpush1.msra.mxu0 0.0
  %804 = vmatprep.subr.mxu0 0.0
  %805 = vmatpush1.msra.mxu0 0.0
  %806 = vmatprep.subr.mxu0 0.0
  %807 = vmatpush1.msra.mxu0 0.0
  %808 = vmatprep.subr.mxu0 0.0
  %809 = vmatpush1.msra.mxu0 0.0
  %810 = vmatprep.subr.mxu0 0.0
  %811 = vmatpush1.msra.mxu0 0.0
  %812 = vmatprep.subr.mxu0 0.0
  %813 = vmatpush1.msra.mxu0 0.0
  %814 = vmatprep.subr.mxu0 0.0
  %815 = vmatpush1.msra.mxu0 0.0
  %816 = vmatprep.subr.mxu0 0.0
  %817 = vmatpush1.msra.mxu0 0.0
  %818 = vmatprep.subr.mxu0 0.0
  %819 = vmatpush1.msra.mxu0 0.0
  %820 = vmatprep.subr.mxu0 0.0
  %821 = vmatpush1.msra.mxu0 0.0
  %822 = vmatprep.mubr.f32.mxu0 0.0
  %823 = vmatmul.mubr.f32.gmra.mrb[0].mxu0 %v756
  %v824 = vpop.f32.mrb[0].mxu0
  %v825 = vadd.f32 %v711, %v824
  %v826 = vpop.f32.mrb[0].mxu0
  %v827 = vadd.f32 %v715, %v826
  %828 = vdwg.mxu0
  %829 = vmatprep.subr.mxu0 %v671
  %830 = vmatpush1.msra.mxu0 %v670
  %831 = vmatprep.subr.mxu0 %v680
  %832 = vmatpush1.msra.mxu0 %v679
  %833 = vmatprep.subr.mxu0 %v689
  %834 = vmatpush1.msra.mxu0 %v688
  %835 = vmatprep.subr.mxu0 %v698
  %836 = vmatpush1.msra.mxu0 %v697
  %837 = vmatprep.subr.mxu0 0.0
  %838 = vmatpush1.msra.mxu0 0.0
  %839 = vmatprep.subr.mxu0 0.0
  %840 = vmatpush1.msra.mxu0 0.0
  %841 = vmatprep.subr.mxu0 0.0
  %842 = vmatpush1.msra.mxu0 0.0
  %843 = vmatprep.subr.mxu0 0.0
  %844 = vmatpush1.msra.mxu0 0.0
  %845 = vmatprep.subr.mxu0 0.0
  %846 = vmatpush1.msra.mxu0 0.0
  %847 = vmatprep.subr.mxu0 0.0
  %848 = vmatpush1.msra.mxu0 0.0
  %849 = vmatprep.subr.mxu0 0.0
  %850 = vmatpush1.msra.mxu0 0.0
  %851 = vmatprep.subr.mxu0 0.0
  %852 = vmatpush1.msra.mxu0 0.0
  %853 = vmatprep.subr.mxu0 0.0
  %854 = vmatpush1.msra.mxu0 0.0
  %855 = vmatprep.subr.mxu0 0.0
  %856 = vmatpush1.msra.mxu0 0.0
  %857 = vmatprep.subr.mxu0 0.0
  %858 = vmatpush1.msra.mxu0 0.0
  %859 = vmatprep.subr.mxu0 0.0
  %860 = vmatpush1.msra.mxu0 0.0
  %861 = vmatprep.subr.mxu0 0.0
  %862 = vmatpush1.msra.mxu0 0.0
  %863 = vmatprep.subr.mxu0 0.0
  %864 = vmatpush1.msra.mxu0 0.0
  %865 = vmatprep.subr.mxu0 0.0
  %866 = vmatpush1.msra.mxu0 0.0
  %867 = vmatprep.subr.mxu0 0.0
  %868 = vmatpush1.msra.mxu0 0.0
  %869 = vmatprep.subr.mxu0 0.0
  %870 = vmatpush1.msra.mxu0 0.0
  %871 = vmatprep.subr.mxu0 0.0
  %872 = vmatpush1.msra.mxu0 0.0
  %873 = vmatprep.subr.mxu0 0.0
  %874 = vmatpush1.msra.mxu0 0.0
  %875 = vmatprep.subr.mxu0 0.0
  %876 = vmatpush1.msra.mxu0 0.0
  %877 = vmatprep.subr.mxu0 0.0
  %878 = vmatpush1.msra.mxu0 0.0
  %879 = vmatprep.subr.mxu0 0.0
  %880 = vmatpush1.msra.mxu0 0.0
  %881 = vmatprep.subr.mxu0 0.0
  %882 = vmatpush1.msra.mxu0 0.0
  %883 = vmatprep.subr.mxu0 0.0
  %884 = vmatpush1.msra.mxu0 0.0
  %885 = vmatprep.subr.mxu0 0.0
  %886 = vmatpush1.msra.mxu0 0.0
  %887 = vmatprep.subr.mxu0 0.0
  %888 = vmatpush1.msra.mxu0 0.0
  %889 = vmatprep.subr.mxu0 0.0
  %890 = vmatpush1.msra.mxu0 0.0
  %891 = vmatprep.subr.mxu0 0.0
  %892 = vmatpush1.msra.mxu0 0.0
  %893 = vmatprep.mubr.f32.mxu0 0.0
  %894 = vmatmul.mubr.f32.gmra.mrb[0].mxu0 %v756
  %v895 = vpop.f32.mrb[0].mxu0
  %v896 = vadd.f32 %v719, %v895
  %v897 = vpop.f32.mrb[0].mxu0
  %v898 = vadd.f32 %v723, %v897
  %899 = vdwg.mxu0
  %900 = vmatprep.subr.mxu0 %v673
  %901 = vmatpush1.msra.mxu0 %v672
  %902 = vmatprep.subr.mxu0 %v682
  %903 = vmatpush1.msra.mxu0 %v681
  %904 = vmatprep.subr.mxu0 %v691
  %905 = vmatpush1.msra.mxu0 %v690
  %906 = vmatprep.subr.mxu0 %v700
  %907 = vmatpush1.msra.mxu0 %v699
  %908 = vmatprep.subr.mxu0 0.0
  %909 = vmatpush1.msra.mxu0 0.0
  %910 = vmatprep.subr.mxu0 0.0
  %911 = vmatpush1.msra.mxu0 0.0
  %912 = vmatprep.subr.mxu0 0.0
  %913 = vmatpush1.msra.mxu0 0.0
  %914 = vmatprep.subr.mxu0 0.0
  %915 = vmatpush1.msra.mxu0 0.0
  %916 = vmatprep.subr.mxu0 0.0
  %917 = vmatpush1.msra.mxu0 0.0
  %918 = vmatprep.subr.mxu0 0.0
  %919 = vmatpush1.msra.mxu0 0.0
  %920 = vmatprep.subr.mxu0 0.0
  %921 = vmatpush1.msra.mxu0 0.0
  %922 = vmatprep.subr.mxu0 0.0
  %923 = vmatpush1.msra.mxu0 0.0
  %924 = vmatprep.subr.mxu0 0.0
  %925 = vmatpush1.msra.mxu0 0.0
  %926 = vmatprep.subr.mxu0 0.0
  %927 = vmatpush1.msra.mxu0 0.0
  %928 = vmatprep.subr.mxu0 0.0
  %929 = vmatpush1.msra.mxu0 0.0
  %930 = vmatprep.subr.mxu0 0.0
  %931 = vmatpush1.msra.mxu0 0.0
  %932 = vmatprep.subr.mxu0 0.0
  %933 = vmatpush1.msra.mxu0 0.0
  %934 = vmatprep.subr.mxu0 0.0
  %935 = vmatpush1.msra.mxu0 0.0
  %936 = vmatprep.subr.mxu0 0.0
  %937 = vmatpush1.msra.mxu0 0.0
  %938 = vmatprep.subr.mxu0 0.0
  %939 = vmatpush1.msra.mxu0 0.0
  %940 = vmatprep.subr.mxu0 0.0
  %941 = vmatpush1.msra.mxu0 0.0
  %942 = vmatprep.subr.mxu0 0.0
  %943 = vmatpush1.msra.mxu0 0.0
  %944 = vmatprep.subr.mxu0 0.0
  %945 = vmatpush1.msra.mxu0 0.0
  %946 = vmatprep.subr.mxu0 0.0
  %947 = vmatpush1.msra.mxu0 0.0
  %948 = vmatprep.subr.mxu0 0.0
  %949 = vmatpush1.msra.mxu0 0.0
  %950 = vmatprep.subr.mxu0 0.0
  %951 = vmatpush1.msra.mxu0 0.0
  %952 = vmatprep.subr.mxu0 0.0
  %953 = vmatpush1.msra.mxu0 0.0
  %954 = vmatprep.subr.mxu0 0.0
  %955 = vmatpush1.msra.mxu0 0.0
  %956 = vmatprep.subr.mxu0 0.0
  %957 = vmatpush1.msra.mxu0 0.0
  %958 = vmatprep.subr.mxu0 0.0
  %959 = vmatpush1.msra.mxu0 0.0
  %960 = vmatprep.subr.mxu0 0.0
  %961 = vmatpush1.msra.mxu0 0.0
  %962 = vmatprep.subr.mxu0 0.0
  %963 = vmatpush1.msra.mxu0 0.0
  %964 = vmatprep.mubr.f32.mxu0 0.0
  %965 = vmatmul.mubr.f32.gmra.mrb[0].mxu0 %v756
  %v966 = vpop.f32.mrb[0].mxu0
  %v967 = vadd.f32 %v727, %v966
  %v968 = vpop.f32.mrb[0].mxu0
  %v969 = vadd.f32 %v731, %v968
  %970 = vdwg.mxu0
  %971 = vmatprep.subr.mxu0 %v675
  %972 = vmatpush1.msra.mxu0 %v674
  %973 = vmatprep.subr.mxu0 %v684
  %974 = vmatpush1.msra.mxu0 %v683
  %975 = vmatprep.subr.mxu0 %v693
  %976 = vmatpush1.msra.mxu0 %v692
  %977 = vmatprep.subr.mxu0 %v702
  %978 = vmatpush1.msra.mxu0 %v701
  %979 = vmatprep.subr.mxu0 0.0
  %980 = vmatpush1.msra.mxu0 0.0
  %981 = vmatprep.subr.mxu0 0.0
  %982 = vmatpush1.msra.mxu0 0.0
  %983 = vmatprep.subr.mxu0 0.0
  %984 = vmatpush1.msra.mxu0 0.0
  %985 = vmatprep.subr.mxu0 0.0
  %986 = vmatpush1.msra.mxu0 0.0
  %987 = vmatprep.subr.mxu0 0.0
  %988 = vmatpush1.msra.mxu0 0.0
  %989 = vmatprep.subr.mxu0 0.0
  %990 = vmatpush1.msra.mxu0 0.0
  %991 = vmatprep.subr.mxu0 0.0
  %992 = vmatpush1.msra.mxu0 0.0
  %993 = vmatprep.subr.mxu0 0.0
  %994 = vmatpush1.msra.mxu0 0.0
  %995 = vmatprep.subr.mxu0 0.0
  %996 = vmatpush1.msra.mxu0 0.0
  %997 = vmatprep.subr.mxu0 0.0
  %998 = vmatpush1.msra.mxu0 0.0
  %999 = vmatprep.subr.mxu0 0.0
  %1000 = vmatpush1.msra.mxu0 0.0
  %1001 = vmatprep.subr.mxu0 0.0
  %1002 = vmatpush1.msra.mxu0 0.0
  %1003 = vmatprep.subr.mxu0 0.0
  %1004 = vmatpush1.msra.mxu0 0.0
  %1005 = vmatprep.subr.mxu0 0.0
  %1006 = vmatpush1.msra.mxu0 0.0
  %1007 = vmatprep.subr.mxu0 0.0
  %1008 = vmatpush1.msra.mxu0 0.0
  %1009 = vmatprep.subr.mxu0 0.0
  %1010 = vmatpush1.msra.mxu0 0.0
  %1011 = vmatprep.subr.mxu0 0.0
  %1012 = vmatpush1.msra.mxu0 0.0
  %1013 = vmatprep.subr.mxu0 0.0
  %1014 = vmatpush1.msra.mxu0 0.0
  %1015 = vmatprep.subr.mxu0 0.0
  %1016 = vmatpush1.msra.mxu0 0.0
  %1017 = vmatprep.subr.mxu0 0.0
  %1018 = vmatpush1.msra.mxu0 0.0
  %1019 = vmatprep.subr.mxu0 0.0
  %1020 = vmatpush1.msra.mxu0 0.0
  %1021 = vmatprep.subr.mxu0 0.0
  %1022 = vmatpush1.msra.mxu0 0.0
  %1023 = vmatprep.subr.mxu0 0.0
  %1024 = vmatpush1.msra.mxu0 0.0
  %1025 = vmatprep.subr.mxu0 0.0
  %1026 = vmatpush1.msra.mxu0 0.0
  %1027 = vmatprep.subr.mxu0 0.0
  %1028 = vmatpush1.msra.mxu0 0.0
  %1029 = vmatprep.subr.mxu0 0.0
  %1030 = vmatpush1.msra.mxu0 0.0
  %1031 = vmatprep.subr.mxu0 0.0
  %1032 = vmatpush1.msra.mxu0 0.0
  %1033 = vmatprep.subr.mxu0 0.0
  %1034 = vmatpush1.msra.mxu0 0.0
  %1035 = vmatprep.mubr.f32.mxu0 0.0
  %1036 = vmatmul.mubr.f32.gmra.mrb[0].mxu0 %v756
  %v1037 = vpop.f32.mrb[0].mxu0
  %v1038 = vadd.f32 %v735, %v1037
  %v1039 = vpop.f32.mrb[0].mxu0
  %v1040 = vadd.f32 %v739, %v1039
  %1041 = vdwg.mxu0
  %1042 = vmatprep.subr.mxu0 0.0
  %1043 = vmatpush1.msra.mxu0 %v676
  %1044 = vmatprep.subr.mxu0 0.0
  %1045 = vmatpush1.msra.mxu0 %v685
  %1046 = vmatprep.subr.mxu0 0.0
  %1047 = vmatpush1.msra.mxu0 %v694
  %1048 = vmatprep.subr.mxu0 0.0
  %1049 = vmatpush1.msra.mxu0 %v703
  %1050 = vmatprep.subr.mxu0 0.0
  %1051 = vmatpush1.msra.mxu0 0.0
  %1052 = vmatprep.subr.mxu0 0.0
  %1053 = vmatpush1.msra.mxu0 0.0
  %1054 = vmatprep.subr.mxu0 0.0
  %1055 = vmatpush1.msra.mxu0 0.0
  %1056 = vmatprep.subr.mxu0 0.0
  %1057 = vmatpush1.msra.mxu0 0.0
  %1058 = vmatprep.subr.mxu0 0.0
  %1059 = vmatpush1.msra.mxu0 0.0
  %1060 = vmatprep.subr.mxu0 0.0
  %1061 = vmatpush1.msra.mxu0 0.0
  %1062 = vmatprep.subr.mxu0 0.0
  %1063 = vmatpush1.msra.mxu0 0.0
  %1064 = vmatprep.subr.mxu0 0.0
  %1065 = vmatpush1.msra.mxu0 0.0
  %1066 = vmatprep.subr.mxu0 0.0
  %1067 = vmatpush1.msra.mxu0 0.0
  %1068 = vmatprep.subr.mxu0 0.0
  %1069 = vmatpush1.msra.mxu0 0.0
  %1070 = vmatprep.subr.mxu0 0.0
  %1071 = vmatpush1.msra.mxu0 0.0
  %1072 = vmatprep.subr.mxu0 0.0
  %1073 = vmatpush1.msra.mxu0 0.0
  %1074 = vmatprep.subr.mxu0 0.0
  %1075 = vmatpush1.msra.mxu0 0.0
  %1076 = vmatprep.subr.mxu0 0.0
  %1077 = vmatpush1.msra.mxu0 0.0
  %1078 = vmatprep.subr.mxu0 0.0
  %1079 = vmatpush1.msra.mxu0 0.0
  %1080 = vmatprep.subr.mxu0 0.0
  %1081 = vmatpush1.msra.mxu0 0.0
  %1082 = vmatprep.subr.mxu0 0.0
  %1083 = vmatpush1.msra.mxu0 0.0
  %1084 = vmatprep.subr.mxu0 0.0
  %1085 = vmatpush1.msra.mxu0 0.0
  %1086 = vmatprep.subr.mxu0 0.0
  %1087 = vmatpush1.msra.mxu0 0.0
  %1088 = vmatprep.subr.mxu0 0.0
  %1089 = vmatpush1.msra.mxu0 0.0
  %1090 = vmatprep.subr.mxu0 0.0
  %1091 = vmatpush1.msra.mxu0 0.0
  %1092 = vmatprep.subr.mxu0 0.0
  %1093 = vmatpush1.msra.mxu0 0.0
  %1094 = vmatprep.subr.mxu0 0.0
  %1095 = vmatpush1.msra.mxu0 0.0
  %1096 = vmatprep.subr.mxu0 0.0
  %1097 = vmatpush1.msra.mxu0 0.0
  %1098 = vmatprep.subr.mxu0 0.0
  %1099 = vmatpush1.msra.mxu0 0.0
  %1100 = vmatprep.subr.mxu0 0.0
  %1101 = vmatpush1.msra.mxu0 0.0
  %1102 = vmatprep.subr.mxu0 0.0
  %1103 = vmatpush1.msra.mxu0 0.0
  %1104 = vmatprep.subr.mxu0 0.0
  %1105 = vmatpush1.msra.mxu0 0.0
  %1106 = vmatprep.mubr.f32.mxu0 0.0
  %1107 = vmatmul.mubr.f32.gmra.mrb[0].mxu0 %v756
  %v1108 = vpop.f32.mrb[0].mxu0
  %v1109 = vadd.f32 %v743, %v1108
  %v1110 = vpop.f32.mrb[0].mxu0
  %1111 = vdwg.mxu0
  %v1121 = vcombine.low %v825, %v827
  %v1122 = vcombine.low %v896, %v898
  %v1124 = vunpack.c.l.s4 1983009808
  %v1125 = vunpack.c.0.s8 %v1124
  %v1126 = vlaneseq
  %v1127 = vshrl.u32 %v1126, 7
  %v1128 = vsub.s32 %v1125, %v1127
  %v1129 = vrot.slane %v1121, %v1128
  %v1131 = vunpack.c.l.s4 1983009808
  %v1132 = vunpack.c.0.s8 %v1131
  %v1133 = vlaneseq
  %v1134 = vshrl.u32 %v1133, 7
  %v1135 = vsub.s32 %v1132, %v1134
  %v1136 = vrot.slane %v1122, %v1135
  %v1137 = vcombine.low %v1129, %v1136
  %v1138 = vcombine.low %v967, %v969
  %v1139 = vcombine.low %v1038, %v1040
  %v1141 = vunpack.c.l.s4 1983009808
  %v1142 = vunpack.c.0.s8 %v1141
  %v1143 = vlaneseq
  %v1144 = vshrl.u32 %v1143, 7
  %v1145 = vsub.s32 %v1142, %v1144
  %v1146 = vrot.slane %v1138, %v1145
  %v1148 = vunpack.c.l.s4 1983009808
  %v1149 = vunpack.c.0.s8 %v1148
  %v1150 = vlaneseq
  %v1151 = vshrl.u32 %v1150, 7
  %v1152 = vsub.s32 %v1149, %v1151
  %v1153 = vrot.slane %v1139, %v1152
  %v1154 = vcombine.low %v1146, %v1153
  %v1156 = vunpack.c.l.s4 1983009808
  %v1157 = vunpack.c.0.s8 %v1156
  %v1158 = vlaneseq
  %v1159 = vshrl.u32 %v1158, 7
  %v1160 = vsub.s32 %v1157, %v1159
  %v1161 = vrot.slane %v1109, %v1160
  %1165 = vst [vmem:[%s6] sm:$0xff] %v1137
  %1166 = vst [vmem:[%s6 + $0x8] sm:$0xff] %v1154
  %1167 = vst [vmem:[%s6 + $0x10] sm:$0x3] %v1161
  // Predicated region
  $region26: #{conv_lstm_vit_forward.1} parent=0 // pred_check
    _
  $region27: #{conv_lstm_vit_forward.1} parent=0 // pred_check_branch
    %1169 = sbr.rel (0) target = $region29
  $region28: #{conv_lstm_vit_forward.1} parent=0 // pred_region
    _
  $region29: #{conv_lstm_vit_forward.1} parent=0 // pred_fallthru
    _
  // Predicated region
  $region30: #{conv_lstm_vit_forward.1} parent=0 // pred_check
    _
  $region31: #{conv_lstm_vit_forward.1} parent=0 // pred_check_branch
    %1171 = sbr.rel (0) target = $region33
  $region32: #{conv_lstm_vit_forward.1} parent=0 // pred_region
    _
  $region33: #{conv_lstm_vit_forward.1} parent=0 // pred_fallthru
    _

</llo_original>
